<compile_context>
chip_gen: v6e
topology: v6e:2x2x1
jax: 0.10.0
libtpu: 0.0.40
codegen_flags: <defaults>
</compile_context>

<pallas_src>
import functools
import math

import jax
import jax.numpy as jnp
from jax.experimental import pallas as pl
from jax.experimental.pallas import tpu as pltpu

_SMOOTH = 1e-6
_LANES = 128              # lane width of the flattened (rows, 128) view
_MAX_TILE_ROWS = 4096     # (4096, 128) f32 block = 2 MiB per input buffer


def _crossentry_kernel(yt_ref, yp_ref, out_ref, *, tiles_per_chunk, tile_rows,
                       valid_rows, needs_mask):
    """Accumulate sum(y_true * log(y_pred + eps)) of one (tile_rows, 128) block
    into this chunk's (8, 128) VMEM-resident output accumulator."""
    j = pl.program_id(1)

    @pl.when(j == 0)
    def _init():
        out_ref[...] = jnp.zeros_like(out_ref)

    yt = yt_ref[...].astype(jnp.float32)
    yp = yp_ref[...].astype(jnp.float32)
    # log() runs on the EUP slot, mul/select/add on the VPU: all hidden under
    # the double-buffered HBM DMA of the next block.
    prod = yt * jnp.log(yp + _SMOOTH)

    if needs_mask:
        # Zero garbage rows of partial / duplicated boundary blocks.  The
        # logical tile index comes from program ids (NOT the clamped index_map),
        # so fully out-of-range tiles contribute exactly 0.
        tile_idx = pl.program_id(0) * tiles_per_chunk + j
        row = tile_idx * tile_rows + jax.lax.broadcasted_iota(
            jnp.int32, prod.shape, 0)
        prod = jnp.where(row < valid_rows, prod, 0.0)

    # Vreg-tree reduction: (tile_rows, 128) -> (tile_rows//8, 8, 128) is a
    # layout no-op; the leading-axis sum is plain VALU vreg adds.
    out_ref[...] += prod.reshape(-1, 8, _LANES).sum(axis=0)


def crossentry(y_true, y_pred, *, num_cores: int = 1):
    """Pallas TPU implementation of -mean(y_true * log(y_pred + 1e-6)).

    num_cores: TensorCores to split the streaming reduction across (pass 2 on
    v7x to engage both cores via CORE_PARALLEL; keep 1 on v5e/v6e).
    """
    # TODO(synk): auto-detect the per-chip TensorCore count (pltpu.get_tpu_info
    # exposes no stable public field for it); v7x callers should pass num_cores=2.
    assert y_true.shape == y_pred.shape, (y_true.shape, y_pred.shape)
    total = math.prod(y_true.shape)
    if total == 0:
        # torch.mean of an empty tensor is NaN; avoid a 0/0 in the kernel path.
        return jnp.full((), jnp.nan, dtype=jnp.float32)

    yt = y_true.reshape(-1)
    yp = y_pred.reshape(-1)

    # ---- (rows, 128) lane-dense view --------------------------------------
    # Zero-copy whenever total is a multiple of 128 and at least one 8x128
    # vreg; otherwise pad minimally (yt pad = 0, yp pad = 1 -> contributes 0).
    if total % _LANES != 0 or total < 8 * _LANES:
        padded_total = pl.cdiv(total, 8 * _LANES) * (8 * _LANES)
        pad = padded_total - total
        yt = jnp.concatenate([yt, jnp.zeros((pad,), yt.dtype)])
        yp = jnp.concatenate([yp, jnp.ones((pad,), yp.dtype)])
    else:
        padded_total = total
    rows = padded_total // _LANES
    yt2 = yt.reshape(rows, _LANES)
    yp2 = yp.reshape(rows, _LANES)

    # ---- tiling ------------------------------------------------------------
    # Small inputs (rows <= 4096, multiple of 8) get a single block / grid (1,1).
    tile_rows = min(_MAX_TILE_ROWS, (rows // 8) * 8)
    n_tiles = pl.cdiv(rows, tile_rows)
    n_chunks = num_cores if (num_cores > 1 and n_tiles >= num_cores) else 1
    tiles_per_chunk = pl.cdiv(n_tiles, n_chunks)
    n_tiles_padded = tiles_per_chunk * n_chunks
    needs_mask = (rows % tile_rows != 0) or (n_tiles_padded != n_tiles)

    # Clamp the block index so padded / boundary tiles never issue an
    # out-of-bounds DMA; their contribution is zeroed by the in-kernel mask.
    def in_map(i, j):
        return (jnp.minimum(i * tiles_per_chunk + j, n_tiles - 1), 0)

    kernel = functools.partial(
        _crossentry_kernel,
        tiles_per_chunk=tiles_per_chunk, tile_rows=tile_rows,
        valid_rows=rows, needs_mask=needs_mask)

    semantics = ((pltpu.CORE_PARALLEL, pltpu.ARBITRARY) if n_chunks > 1
                 else ("arbitrary", "arbitrary"))

    partials = pl.pallas_call(
        kernel,
        out_shape=jax.ShapeDtypeStruct((n_chunks * 8, _LANES), jnp.float32),
        grid=(n_chunks, tiles_per_chunk),
        in_specs=[
            pl.BlockSpec((tile_rows, _LANES), in_map),
            pl.BlockSpec((tile_rows, _LANES), in_map),
        ],
        out_specs=pl.BlockSpec((8, _LANES), lambda i, j: (i, 0)),
        compiler_params=pltpu.CompilerParams(dimension_semantics=semantics),
        cost_estimate=pl.CostEstimate(
            flops=3 * padded_total,
            transcendentals=padded_total,
            bytes_accessed=yt2.size * yt2.dtype.itemsize
            + yp2.size * yp2.dtype.itemsize + n_chunks * 8 * _LANES * 4),
    )(yt2, yp2)

    # Tiny cross-chunk / cross-lane combine; divide by the TRUE element count
    # so masking / padding never changes the mean.
    return -jnp.sum(partials) / total


def _reference(y_true, y_pred):
    """Pure-JAX reference mirroring the PyTorch module."""
    yt = y_true.astype(jnp.float32)
    yp = y_pred.astype(jnp.float32)
    return -jnp.mean(yt * jnp.log(yp + _SMOOTH))


if __name__ == "__main__":
    key = jax.random.PRNGKey(0)
    k1, k2 = jax.random.split(key)

    # Segmentation-style (N, C, D, H, W) volume: binary labels (exact in bf16,
    # half the HBM traffic) vs. predicted probabilities in f32.  Note: soft
    # labels would need f32 y_true to match the reference bit-for-bit.
    shape = (2, 4, 16, 16, 16)
    y_true = jax.random.bernoulli(k1, p=0.3, shape=shape).astype(jnp.bfloat16)
    y_pred = jax.random.uniform(k2, shape=shape, dtype=jnp.float32,
                                minval=0.05, maxval=0.95)

    out = jax.block_until_ready(jax.jit(crossentry)(y_true, y_pred))
    ref = jax.block_until_ready(_reference(y_true, y_pred))
    assert jnp.allclose(out, ref, rtol=1e-5, atol=1e-5), (out, ref)
    print("KERNEL_OK")
</pallas_src>

<mosaic_0001>
module attributes {stable_mosaic.version = 11 : i64} {
  func.func @_crossentry_kernel(%arg0: i32, %arg1: i32, %arg2: memref<256x128xbf16, #tpu.memory_space<vmem>>, %arg3: memref<256x128xf32, #tpu.memory_space<vmem>>, %arg4: memref<8x128xf32, #tpu.memory_space<vmem>>) attributes {dimension_semantics = [#tpu.dimension_semantics<arbitrary>, #tpu.dimension_semantics<arbitrary>], iteration_bounds = array<i64: 1, 1>, scalar_prefetch = 0 : i64, scratch_operands = 0 : i64, tpu.core_type = #tpu.core_type<tc>, window_params = [{transform_indices = @transform_0, window_bounds = array<i64: 256, 128>}, {transform_indices = @transform_1, window_bounds = array<i64: 256, 128>}, {transform_indices = @transform_2, window_bounds = array<i64: 8, 128>}]} {
    %c0_i32 = arith.constant 0 : i32
    %0 = arith.cmpi eq, %arg1, %c0_i32 : i32
    %1 = arith.extui %0 : i1 to i32
    %c0_i32_0 = arith.constant 0 : i32
    %2 = arith.cmpi ne, %1, %c0_i32_0 : i32
    scf.if %2 {
      %cst_9 = arith.constant 0.000000e+00 : f32
      %15 = vector.broadcast %cst_9 : f32 to vector<8x128xf32>
      %c0_10 = arith.constant 0 : index
      %c0_11 = arith.constant 0 : index
      %16 = vector.load %arg4[%c0_10, %c0_11] : memref<8x128xf32, #tpu.memory_space<vmem>>, vector<8x128xf32>
      tpu.vector_store %arg4[%c0_10, %c0_11], %15 {strides = array<i32>} : memref<8x128xf32, #tpu.memory_space<vmem>>, vector<8x128xf32>,
    } else {
    }
    %c0 = arith.constant 0 : index
    %c0_1 = arith.constant 0 : index
    %3 = vector.load %arg2[%c0, %c0_1] : memref<256x128xbf16, #tpu.memory_space<vmem>>, vector<256x128xbf16>
    %4 = arith.extf %3 : vector<256x128xbf16> to vector<256x128xf32>
    %c0_2 = arith.constant 0 : index
    %c0_3 = arith.constant 0 : index
    %5 = vector.load %arg3[%c0_2, %c0_3] : memref<256x128xf32, #tpu.memory_space<vmem>>, vector<256x128xf32>
    %cst = arith.constant 9.99999997E-7 : f32
    %6 = vector.broadcast %cst : f32 to vector<256x128xf32>
    %7 = arith.addf %5, %6 : vector<256x128xf32>
    %8 = math.log %7 : vector<256x128xf32>
    %9 = arith.mulf %4, %8 : vector<256x128xf32>
    %c0_4 = arith.constant 0 : index
    %c0_5 = arith.constant 0 : index
    %10 = vector.load %arg4[%c0_4, %c0_5] : memref<8x128xf32, #tpu.memory_space<vmem>>, vector<8x128xf32>
    %11 = vector.shape_cast %9 : vector<256x128xf32> to vector<32x8x128xf32>
    %cst_6 = arith.constant dense<0.000000e+00> : vector<8x128xf32>
    %12 = vector.multi_reduction <add>, %11, %cst_6 [0] : vector<32x8x128xf32> to vector<8x128xf32>
    %13 = arith.addf %10, %12 : vector<8x128xf32>
    %c0_7 = arith.constant 0 : index
    %c0_8 = arith.constant 0 : index
    %14 = vector.load %arg4[%c0_7, %c0_8] : memref<8x128xf32, #tpu.memory_space<vmem>>, vector<8x128xf32>
    tpu.vector_store %arg4[%c0_7, %c0_8], %13 {strides = array<i32>} : memref<8x128xf32, #tpu.memory_space<vmem>>, vector<8x128xf32>,
    return
  }
  func.func @transform_0(%arg0: i32, %arg1: i32) -> (i32, i32) {
    %c1_i32 = arith.constant 1 : i32
    %0 = arith.muli %arg0, %c1_i32 : i32
    %1 = arith.addi %0, %arg1 : i32
    %c0_i32 = arith.constant 0 : i32
    %2 = arith.minsi %1, %c0_i32 : i32
    %c0_i32_0 = arith.constant 0 : i32
    %c0_i32_1 = arith.constant 0 : i32
    return %2, %c0_i32_0 : i32, i32
  }
  func.func @transform_1(%arg0: i32, %arg1: i32) -> (i32, i32) {
    %c1_i32 = arith.constant 1 : i32
    %0 = arith.muli %arg0, %c1_i32 : i32
    %1 = arith.addi %0, %arg1 : i32
    %c0_i32 = arith.constant 0 : i32
    %2 = arith.minsi %1, %c0_i32 : i32
    %c0_i32_0 = arith.constant 0 : i32
    %c0_i32_1 = arith.constant 0 : i32
    return %2, %c0_i32_0 : i32, i32
  }
  func.func @transform_2(%arg0: i32, %arg1: i32) -> (i32, i32) {
    %c0_i32 = arith.constant 0 : i32
    %c0_i32_0 = arith.constant 0 : i32
    return %arg0, %c0_i32 : i32, i32
  }
}

</mosaic_0001>

<llo_original>
// kernel: crossentry.1
$region0: #{crossentry.1}
  #allocation0 [shape = 'u32[]', space=smem, size = 0x4, offset = 0x4, fixed_abs, tag = 'smem constant byte address 0x4 - core index']
  #allocation1 [shape = 'u32[144,128]{1,0:T(1,128)}', space=vmem, size = 0x12000, scoped, tag = 'internal scratch']
  %s0 = inlined_call_operand.vmem [shape: bf16[256,128], index: 0, kind: input, shape index: {}]
  %s1 = inlined_call_operand.vmem [shape: f32[256,128], index: 1, kind: input, shape index: {}]
  %s2 = inlined_call_operand.vmem [shape: f32[8,128], index: 2, kind: output, shape index: {}]
  %s3 = sld [smem:[#allocation0]]
  $region22: #{crossentry.1} parent=0
    _
  %s5 = ssub.s32 1, %s3
  %s6 = scalar_select 0, %s5, %s3
  // Predicated region
  $region2: #{crossentry.1} parent=0 // pred_check
    _
  $region3: #{crossentry.1} parent=0 // pred_check_branch
    %8 = sbr.rel (0) target = $region5
  $region4: #{crossentry.1} parent=0 // pred_region
    %s9 = sadd.s32 0, 0
    %p10 = scmp.lt.s32.totalorder %s9, 0
    %s11 = scalar_select %p10, %s9, 0
    %s12 = smul.u32 32, %s11
    %p13 = scmp.lt.s32.totalorder %s12, 31
    %s14 = scalar_select %p13, %s12, 31
    %s15 = smul.addr %s14, 4
    %s16 = scalar_lea.vmem %s0, %s15
    %s17 = sadd.s32 0, 0
    %p18 = scmp.lt.s32.totalorder %s17, 0
    %s19 = scalar_select %p18, %s17, 0
    %s20 = smul.u32 32, %s19
  $region5: #{crossentry.1} parent=0 // pred_fallthru
    _
  // Predicated region
  $region6: #{crossentry.1} parent=0 // pred_check
    _
  $region7: #{crossentry.1} parent=0 // pred_check_branch
    %22 = sbr.rel (0) target = $region9
  $region8: #{crossentry.1} parent=0 // pred_region
    %s23 = sadd.s32 0, 0
    %p24 = scmp.lt.s32.totalorder %s23, 0
    %s25 = scalar_select %p24, %s23, 0
    %s26 = smul.u32 32, %s25
    %p27 = scmp.lt.s32.totalorder %s26, 31
    %s28 = scalar_select %p27, %s26, 31
    %s29 = smul.addr %s28, 8
    %s30 = scalar_lea.vmem %s1, %s29
    %s31 = sadd.s32 0, 0
    %p32 = scmp.lt.s32.totalorder %s31, 0
    %s33 = scalar_select %p32, %s31, 0
    %s34 = smul.u32 32, %s33
  $region9: #{crossentry.1} parent=0 // pred_fallthru
    _
  %s35 = sadd.s32 0, 0
  %p36 = scmp.lt.s32.totalorder %s35, 0
  %s37 = scalar_select %p36, %s35, 0
  %s38 = smul.u32 32, %s37
  %p39 = scmp.lt.s32.totalorder %s38, 31
  %s40 = scalar_select %p39, %s38, 31
  %s41 = smul.addr %s40, 4
  %s42 = scalar_lea.vmem %s0, %s41
  %s43 = sadd.s32 0, 0
  %p44 = scmp.lt.s32.totalorder %s43, 0
  %s45 = scalar_select %p44, %s43, 0
  %s46 = smul.u32 32, %s45
  %p47 = scmp.lt.s32.totalorder %s46, 31
  %s48 = scalar_select %p47, %s46, 31
  %s49 = smul.addr %s48, 8
  %s50 = scalar_lea.vmem %s1, %s49
  %s51 = sadd.s32 0, 0
  %p52 = scmp.lt.s32.totalorder %s51, 0
  %s53 = scalar_select %p52, %s51, 0
  %s54 = smul.u32 32, %s53
  %p55 = scmp.lt.s32.totalorder %s54, 31
  %s56 = scalar_select %p55, %s54, 31
  %s57 = smul.addr %s56, 4
  %s58 = scalar_lea.vmem %s0, %s57
  %s59 = sadd.s32 0, 0
  %p60 = scmp.lt.s32.totalorder %s59, 0
  %s61 = scalar_select %p60, %s59, 0
  %s62 = smul.u32 32, %s61
  %s63 = sadd.s32 0, 0
  %p64 = scmp.lt.s32.totalorder %s63, 0
  %s65 = scalar_select %p64, %s63, 0
  %s66 = smul.u32 32, %s65
  %p67 = scmp.lt.s32.totalorder %s66, 31
  %s68 = scalar_select %p67, %s66, 31
  %s69 = smul.addr %s68, 8
  %s70 = scalar_lea.vmem %s1, %s69
  %s71 = sadd.s32 0, 0
  %p72 = scmp.lt.s32.totalorder %s71, 0
  %s73 = scalar_select %p72, %s71, 0
  %s74 = smul.u32 32, %s73
  %p75 = scmp.eq.s32.totalorder 0, 0
  // Predicated region
  $region10: #{crossentry.1} parent=0 // pred_check
    %p76 = pneg %p75
  $region11: #{crossentry.1} parent=0 // pred_check_branch
    %78 = sbr.rel (%p76) target = $region13
  $region12: #{crossentry.1} parent=0 // pred_region
    %79 = vst [vmem:[%s2] sm:$0xff] 0.0
  $region13: #{crossentry.1} parent=0 // pred_fallthru
    _
  %v80 = vld [vmem:[%s58] sm:$0xf]
  %v81 = vld [vmem:[%s58 + $0x4] sm:$0xf]
  %v82 = vld [vmem:[%s58 + $0x8] sm:$0xf]
  %v83 = vld [vmem:[%s58 + $0xc] sm:$0xf]
  %v84 = vld [vmem:[%s58 + $0x10] sm:$0xf]
  %v85 = vld [vmem:[%s58 + $0x14] sm:$0xf]
  %v86 = vld [vmem:[%s58 + $0x18] sm:$0xf]
  %v87 = vld [vmem:[%s58 + $0x1c] sm:$0xf]
  %v88 = vld [vmem:[%s58 + $0x20] sm:$0xf]
  %v89 = vld [vmem:[%s58 + $0x24] sm:$0xf]
  %v90 = vld [vmem:[%s58 + $0x28] sm:$0xf]
  %v91 = vld [vmem:[%s58 + $0x2c] sm:$0xf]
  %v92 = vld [vmem:[%s58 + $0x30] sm:$0xf]
  %v93 = vld [vmem:[%s58 + $0x34] sm:$0xf]
  %v94 = vld [vmem:[%s58 + $0x38] sm:$0xf]
  %v95 = vld [vmem:[%s58 + $0x3c] sm:$0xf]
  %v96 = vld [vmem:[%s58 + $0x40] sm:$0xf]
  %v97 = vld [vmem:[%s58 + $0x44] sm:$0xf]
  %v98 = vld [vmem:[%s58 + $0x48] sm:$0xf]
  %v99 = vld [vmem:[%s58 + $0x4c] sm:$0xf]
  %v100 = vld [vmem:[%s58 + $0x50] sm:$0xf]
  %v101 = vld [vmem:[%s58 + $0x54] sm:$0xf]
  %v102 = vld [vmem:[%s58 + $0x58] sm:$0xf]
  %v103 = vld [vmem:[%s58 + $0x5c] sm:$0xf]
  %v104 = vld [vmem:[%s58 + $0x60] sm:$0xf]
  %v105 = vld [vmem:[%s58 + $0x64] sm:$0xf]
  %v106 = vld [vmem:[%s58 + $0x68] sm:$0xf]
  %v107 = vld [vmem:[%s58 + $0x6c] sm:$0xf]
  %v108 = vld [vmem:[%s58 + $0x70] sm:$0xf]
  %v109 = vld [vmem:[%s58 + $0x74] sm:$0xf]
  %v110 = vld [vmem:[%s58 + $0x78] sm:$0xf]
  %v111 = vld [vmem:[%s58 + $0x7c] sm:$0xf]
  %v112 = vunpack.c.l.bf16 %v80
  %v113 = vunpack.c.l.bf16 %v81
  %v114 = vunpack.c.l.bf16 %v82
  %v115 = vunpack.c.l.bf16 %v83
  %v116 = vunpack.c.l.bf16 %v84
  %v117 = vunpack.c.l.bf16 %v85
  %v118 = vunpack.c.l.bf16 %v86
  %v119 = vunpack.c.l.bf16 %v87
  %v120 = vunpack.c.l.bf16 %v88
  %v121 = vunpack.c.l.bf16 %v89
  %v122 = vunpack.c.l.bf16 %v90
  %v123 = vunpack.c.l.bf16 %v91
  %v124 = vunpack.c.l.bf16 %v92
  %v125 = vunpack.c.l.bf16 %v93
  %v126 = vunpack.c.l.bf16 %v94
  %v127 = vunpack.c.l.bf16 %v95
  %v128 = vunpack.c.l.bf16 %v96
  %v129 = vunpack.c.l.bf16 %v97
  %v130 = vunpack.c.l.bf16 %v98
  %v131 = vunpack.c.l.bf16 %v99
  %v132 = vunpack.c.l.bf16 %v100
  %v133 = vunpack.c.l.bf16 %v101
  %v134 = vunpack.c.l.bf16 %v102
  %v135 = vunpack.c.l.bf16 %v103
  %v136 = vunpack.c.l.bf16 %v104
  %v137 = vunpack.c.l.bf16 %v105
  %v138 = vunpack.c.l.bf16 %v106
  %v139 = vunpack.c.l.bf16 %v107
  %v140 = vunpack.c.l.bf16 %v108
  %v141 = vunpack.c.l.bf16 %v109
  %v142 = vunpack.c.l.bf16 %v110
  %v143 = vunpack.c.l.bf16 %v111
  %v144 = vld [vmem:[%s70] sm:$0xff]
  %v145 = vld [vmem:[%s70 + $0x8] sm:$0xff]
  %v146 = vld [vmem:[%s70 + $0x10] sm:$0xff]
  %v147 = vld [vmem:[%s70 + $0x18] sm:$0xff]
  %v148 = vld [vmem:[%s70 + $0x20] sm:$0xff]
  %v149 = vld [vmem:[%s70 + $0x28] sm:$0xff]
  %v150 = vld [vmem:[%s70 + $0x30] sm:$0xff]
  %v151 = vld [vmem:[%s70 + $0x38] sm:$0xff]
  %v152 = vld [vmem:[%s70 + $0x40] sm:$0xff]
  %v153 = vld [vmem:[%s70 + $0x48] sm:$0xff]
  %v154 = vld [vmem:[%s70 + $0x50] sm:$0xff]
  %v155 = vld [vmem:[%s70 + $0x58] sm:$0xff]
  %v156 = vld [vmem:[%s70 + $0x60] sm:$0xff]
  %v157 = vld [vmem:[%s70 + $0x68] sm:$0xff]
  %v158 = vld [vmem:[%s70 + $0x70] sm:$0xff]
  %v159 = vld [vmem:[%s70 + $0x78] sm:$0xff]
  %v160 = vld [vmem:[%s70 + $0x80] sm:$0xff]
  %v161 = vld [vmem:[%s70 + $0x88] sm:$0xff]
  %v162 = vld [vmem:[%s70 + $0x90] sm:$0xff]
  %v163 = vld [vmem:[%s70 + $0x98] sm:$0xff]
  %v164 = vld [vmem:[%s70 + $0xa0] sm:$0xff]
  %v165 = vld [vmem:[%s70 + $0xa8] sm:$0xff]
  %v166 = vld [vmem:[%s70 + $0xb0] sm:$0xff]
  %v167 = vld [vmem:[%s70 + $0xb8] sm:$0xff]
  %v168 = vld [vmem:[%s70 + $0xc0] sm:$0xff]
  %v169 = vld [vmem:[%s70 + $0xc8] sm:$0xff]
  %v170 = vld [vmem:[%s70 + $0xd0] sm:$0xff]
  %v171 = vld [vmem:[%s70 + $0xd8] sm:$0xff]
  %v172 = vld [vmem:[%s70 + $0xe0] sm:$0xff]
  %v173 = vld [vmem:[%s70 + $0xe8] sm:$0xff]
  %v174 = vld [vmem:[%s70 + $0xf0] sm:$0xff]
  %v175 = vld [vmem:[%s70 + $0xf8] sm:$0xff]
  %v176 = vadd.f32 %v144, 1e-06
  %v177 = vadd.f32 %v145, 1e-06
  %v178 = vadd.f32 %v146, 1e-06
  %v179 = vadd.f32 %v147, 1e-06
  %v180 = vadd.f32 %v148, 1e-06
  %v181 = vadd.f32 %v149, 1e-06
  %v182 = vadd.f32 %v150, 1e-06
  %v183 = vadd.f32 %v151, 1e-06
  %v184 = vadd.f32 %v152, 1e-06
  %v185 = vadd.f32 %v153, 1e-06
  %v186 = vadd.f32 %v154, 1e-06
  %v187 = vadd.f32 %v155, 1e-06
  %v188 = vadd.f32 %v156, 1e-06
  %v189 = vadd.f32 %v157, 1e-06
  %v190 = vadd.f32 %v158, 1e-06
  %v191 = vadd.f32 %v159, 1e-06
  %v192 = vadd.f32 %v160, 1e-06
  %v193 = vadd.f32 %v161, 1e-06
  %v194 = vadd.f32 %v162, 1e-06
  %v195 = vadd.f32 %v163, 1e-06
  %v196 = vadd.f32 %v164, 1e-06
  %v197 = vadd.f32 %v165, 1e-06
  %v198 = vadd.f32 %v166, 1e-06
  %v199 = vadd.f32 %v167, 1e-06
  %v200 = vadd.f32 %v168, 1e-06
  %v201 = vadd.f32 %v169, 1e-06
  %v202 = vadd.f32 %v170, 1e-06
  %v203 = vadd.f32 %v171, 1e-06
  %v204 = vadd.f32 %v172, 1e-06
  %v205 = vadd.f32 %v173, 1e-06
  %v206 = vadd.f32 %v174, 1e-06
  %v207 = vadd.f32 %v175, 1e-06
  %v208 = vlog2.pop %v176
  %v209 = vmul.f32 %v208, 0.6931472
  %v210 = vlog2.pop %v177
  %v211 = vmul.f32 %v210, 0.6931472
  %v212 = vlog2.pop %v178
  %v213 = vmul.f32 %v212, 0.6931472
  %v214 = vlog2.pop %v179
  %v215 = vmul.f32 %v214, 0.6931472
  %v216 = vlog2.pop %v180
  %v217 = vmul.f32 %v216, 0.6931472
  %v218 = vlog2.pop %v181
  %v219 = vmul.f32 %v218, 0.6931472
  %v220 = vlog2.pop %v182
  %v221 = vmul.f32 %v220, 0.6931472
  %v222 = vlog2.pop %v183
  %v223 = vmul.f32 %v222, 0.6931472
  %v224 = vlog2.pop %v184
  %v225 = vmul.f32 %v224, 0.6931472
  %v226 = vlog2.pop %v185
  %v227 = vmul.f32 %v226, 0.6931472
  %v228 = vlog2.pop %v186
  %v229 = vmul.f32 %v228, 0.6931472
  %v230 = vlog2.pop %v187
  %v231 = vmul.f32 %v230, 0.6931472
  %v232 = vlog2.pop %v188
  %v233 = vmul.f32 %v232, 0.6931472
  %v234 = vlog2.pop %v189
  %v235 = vmul.f32 %v234, 0.6931472
  %v236 = vlog2.pop %v190
  %v237 = vmul.f32 %v236, 0.6931472
  %v238 = vlog2.pop %v191
  %v239 = vmul.f32 %v238, 0.6931472
  %v240 = vlog2.pop %v192
  %v241 = vmul.f32 %v240, 0.6931472
  %v242 = vlog2.pop %v193
  %v243 = vmul.f32 %v242, 0.6931472
  %v244 = vlog2.pop %v194
  %v245 = vmul.f32 %v244, 0.6931472
  %v246 = vlog2.pop %v195
  %v247 = vmul.f32 %v246, 0.6931472
  %v248 = vlog2.pop %v196
  %v249 = vmul.f32 %v248, 0.6931472
  %v250 = vlog2.pop %v197
  %v251 = vmul.f32 %v250, 0.6931472
  %v252 = vlog2.pop %v198
  %v253 = vmul.f32 %v252, 0.6931472
  %v254 = vlog2.pop %v199
  %v255 = vmul.f32 %v254, 0.6931472
  %v256 = vlog2.pop %v200
  %v257 = vmul.f32 %v256, 0.6931472
  %v258 = vlog2.pop %v201
  %v259 = vmul.f32 %v258, 0.6931472
  %v260 = vlog2.pop %v202
  %v261 = vmul.f32 %v260, 0.6931472
  %v262 = vlog2.pop %v203
  %v263 = vmul.f32 %v262, 0.6931472
  %v264 = vlog2.pop %v204
  %v265 = vmul.f32 %v264, 0.6931472
  %v266 = vlog2.pop %v205
  %v267 = vmul.f32 %v266, 0.6931472
  %v268 = vlog2.pop %v206
  %v269 = vmul.f32 %v268, 0.6931472
  %v270 = vlog2.pop %v207
  %v271 = vmul.f32 %v270, 0.6931472
  %v272 = vmul.f32 %v112, %v209
  %v273 = vmul.f32 %v113, %v211
  %v274 = vmul.f32 %v114, %v213
  %v275 = vmul.f32 %v115, %v215
  %v276 = vmul.f32 %v116, %v217
  %v277 = vmul.f32 %v117, %v219
  %v278 = vmul.f32 %v118, %v221
  %v279 = vmul.f32 %v119, %v223
  %v280 = vmul.f32 %v120, %v225
  %v281 = vmul.f32 %v121, %v227
  %v282 = vmul.f32 %v122, %v229
  %v283 = vmul.f32 %v123, %v231
  %v284 = vmul.f32 %v124, %v233
  %v285 = vmul.f32 %v125, %v235
  %v286 = vmul.f32 %v126, %v237
  %v287 = vmul.f32 %v127, %v239
  %v288 = vmul.f32 %v128, %v241
  %v289 = vmul.f32 %v129, %v243
  %v290 = vmul.f32 %v130, %v245
  %v291 = vmul.f32 %v131, %v247
  %v292 = vmul.f32 %v132, %v249
  %v293 = vmul.f32 %v133, %v251
  %v294 = vmul.f32 %v134, %v253
  %v295 = vmul.f32 %v135, %v255
  %v296 = vmul.f32 %v136, %v257
  %v297 = vmul.f32 %v137, %v259
  %v298 = vmul.f32 %v138, %v261
  %v299 = vmul.f32 %v139, %v263
  %v300 = vmul.f32 %v140, %v265
  %v301 = vmul.f32 %v141, %v267
  %v302 = vmul.f32 %v142, %v269
  %v303 = vmul.f32 %v143, %v271
  %v304 = vld [vmem:[%s2] sm:$0xff]
  %v305 = vadd.f32 %v272, %v273
  %v306 = vadd.f32 %v305, %v274
  %v307 = vadd.f32 %v306, %v275
  %v308 = vadd.f32 %v307, %v276
  %v309 = vadd.f32 %v308, %v277
  %v310 = vadd.f32 %v309, %v278
  %v311 = vadd.f32 %v310, %v279
  %v312 = vadd.f32 %v311, %v280
  %v313 = vadd.f32 %v312, %v281
  %v314 = vadd.f32 %v313, %v282
  %v315 = vadd.f32 %v314, %v283
  %v316 = vadd.f32 %v315, %v284
  %v317 = vadd.f32 %v316, %v285
  %v318 = vadd.f32 %v317, %v286
  %v319 = vadd.f32 %v318, %v287
  %v320 = vadd.f32 %v319, %v288
  %v321 = vadd.f32 %v320, %v289
  %v322 = vadd.f32 %v321, %v290
  %v323 = vadd.f32 %v322, %v291
  %v324 = vadd.f32 %v323, %v292
  %v325 = vadd.f32 %v324, %v293
  %v326 = vadd.f32 %v325, %v294
  %v327 = vadd.f32 %v326, %v295
  %v328 = vadd.f32 %v327, %v296
  %v329 = vadd.f32 %v328, %v297
  %v330 = vadd.f32 %v329, %v298
  %v331 = vadd.f32 %v330, %v299
  %v332 = vadd.f32 %v331, %v300
  %v333 = vadd.f32 %v332, %v301
  %v334 = vadd.f32 %v333, %v302
  %v335 = vadd.f32 %v334, %v303
  %v336 = vadd.f32 %v304, %v335
  %337 = vst [vmem:[%s2] sm:$0xff] %v336
  // Predicated region
  $region14: #{crossentry.1} parent=0 // pred_check
    _
  $region15: #{crossentry.1} parent=0 // pred_check_branch
    %339 = sbr.rel (0) target = $region17
  $region16: #{crossentry.1} parent=0 // pred_region
    _
  $region17: #{crossentry.1} parent=0 // pred_fallthru
    _
  // Predicated region
  $region18: #{crossentry.1} parent=0 // pred_check
    _
  $region19: #{crossentry.1} parent=0 // pred_check_branch
    %341 = sbr.rel (0) target = $region21
  $region20: #{crossentry.1} parent=0 // pred_region
    _
  $region21: #{crossentry.1} parent=0 // pred_fallthru
    _

</llo_original>
